<compile_context>
chip_gen: v7x
topology: tpu7x:2x2x1
jax: 0.10.0
libtpu: 0.0.40
codegen_flags: <defaults>
</compile_context>

<pallas_src>
import jax
import jax.numpy as jnp
from jax.experimental import pallas as pl
from jax.experimental.pallas import tpu as pltpu

_LANE = 128                              # lane width / MXU alignment unit
_GRIDLESS_BYTES = 16 * 1024 * 1024       # operands+output must fit comfortably in VMEM
_VMEM_LIMIT = 48 * 1024 * 1024           # safe on v7x (64 MiB phys); raises v5e/v6e defaults


def _round_up(x, m):
    return ((x + m - 1) // m) * m


# ----------------------------------------------------------------------------
# Kernel bodies
# ----------------------------------------------------------------------------
def _matmul_2x_single_kernel(a_ref, b_ref, o_ref):
    # Whole operands resident in VMEM; one MXU matmul, scale output by 2.
    acc = jnp.dot(a_ref[...], b_ref[...], preferred_element_type=jnp.float32)
    o_ref[...] = (2.0 * acc).astype(o_ref.dtype)


def _matmul_2x_tiled_f32_kernel(a_ref, b_ref, o_ref):
    # f32 output block is resident across the innermost K grid axis, so we
    # accumulate directly into it (no scratch accumulator).
    @pl.when(pl.program_id(2) == 0)
    def _():
        o_ref[...] = jnp.zeros_like(o_ref)

    o_ref[...] += jnp.dot(a_ref[...], b_ref[...],
                          preferred_element_type=jnp.float32)

    @pl.when(pl.program_id(2) == pl.num_programs(2) - 1)
    def _():
        # a @ (b + b) == 2 * (a @ b): fold the doubling into the finalize.
        o_ref[...] = 2.0 * o_ref[...]


def _matmul_2x_tiled_acc_kernel(a_ref, b_ref, o_ref, acc_ref):
    # Generic-dtype variant (only used when the output is not f32): keep an
    # f32 scratch accumulator and cast on finalize.
    @pl.when(pl.program_id(2) == 0)
    def _():
        acc_ref[...] = jnp.zeros_like(acc_ref)

    acc_ref[...] += jnp.dot(a_ref[...], b_ref[...],
                            preferred_element_type=jnp.float32)

    @pl.when(pl.program_id(2) == pl.num_programs(2) - 1)
    def _():
        o_ref[...] = (2.0 * acc_ref[...]).astype(o_ref.dtype)


# ----------------------------------------------------------------------------
# Wrapper
# ----------------------------------------------------------------------------
def matmul_double_b(a: jax.Array, b: jax.Array, *,
                    tm=256, tn=512, tk=512, _force_tiled=False):
    """Computes a.matmul(b + b) for 2-D a [M, K] and b [K, N]."""
    M, K = a.shape
    K2, N = b.shape
    assert K == K2, "inner dimensions must match"
    out_dtype = a.dtype
    itemsize = a.dtype.itemsize
    total_bytes = itemsize * (M * K + K * N + M * N)

    # ---- Small-operand path: no grid, operands fully resident in VMEM. ----
    if total_bytes <= _GRIDLESS_BYTES and not _force_tiled:
        cost = pl.CostEstimate(flops=2 * M * N * K + M * N,
                               transcendentals=0,
                               bytes_accessed=total_bytes)
        return pl.pallas_call(
            _matmul_2x_single_kernel,
            out_shape=jax.ShapeDtypeStruct((M, N), out_dtype),
            in_specs=[
                pl.BlockSpec(memory_space=pltpu.MemorySpace.VMEM),
                pl.BlockSpec(memory_space=pltpu.MemorySpace.VMEM),
            ],
            out_specs=pl.BlockSpec(memory_space=pltpu.MemorySpace.VMEM),
            compiler_params=pltpu.CompilerParams(vmem_limit_bytes=_VMEM_LIMIT),
            cost_estimate=cost,
        )(a, b)

    # ---- Tiled path (large and/or unaligned shapes). -----------------------
    # Clamp tiles to the lane-aligned problem size (keeps them multiples of
    # 128 so the (8,128) block constraint is always satisfied).
    tm_e = max(_LANE, (min(tm, _round_up(M, _LANE)) // _LANE) * _LANE)
    tn_e = max(_LANE, (min(tn, _round_up(N, _LANE)) // _LANE) * _LANE)
    tk_e = max(_LANE, (min(tk, _round_up(K, _LANE)) // _LANE) * _LANE)

    Mp = _round_up(M, tm_e)
    Np = _round_up(N, tn_e)
    Kp = _round_up(K, tk_e)

    # v7x has 2 TensorCores: make sure the parallel (M, N) grid has >= 2
    # blocks so both cores get work (no-op on single-TC v5e/v6e).
    if (Mp // tm_e) * (Np // tn_e) < 2:
        if tn_e >= 2 * _LANE and N > _LANE:
            tn_e //= 2
            Np = _round_up(N, tn_e)
        elif tm_e >= 2 * _LANE and M > _LANE:
            tm_e //= 2
            Mp = _round_up(M, tm_e)

    # Zero-padding is exact for matmul (padded K contributes 0); padded M/N
    # rows/cols are sliced off the output.
    a_p = a if (Mp == M and Kp == K) else jnp.pad(a, ((0, Mp - M), (0, Kp - K)))
    b_p = b if (Kp == K and Np == N) else jnp.pad(b, ((0, Kp - K), (0, Np - N)))

    grid = (Mp // tm_e, Np // tn_e, Kp // tk_e)
    cost = pl.CostEstimate(
        flops=2 * Mp * Np * Kp + Mp * Np,
        transcendentals=0,
        bytes_accessed=itemsize * (Mp * Kp * grid[1] + Kp * Np * grid[0] + Mp * Np))

    if out_dtype == jnp.float32:
        kernel, scratch = _matmul_2x_tiled_f32_kernel, []
    else:
        kernel = _matmul_2x_tiled_acc_kernel
        scratch = [pltpu.VMEM((tm_e, tn_e), jnp.float32)]

    out = pl.pallas_call(
        kernel,
        out_shape=jax.ShapeDtypeStruct((Mp, Np), out_dtype),
        grid_spec=pltpu.PrefetchScalarGridSpec(
            num_scalar_prefetch=0,
            grid=grid,
            in_specs=[
                pl.BlockSpec((tm_e, tk_e), lambda i, j, k: (i, k)),
                pl.BlockSpec((tk_e, tn_e), lambda i, j, k: (k, j)),
            ],
            out_specs=pl.BlockSpec((tm_e, tn_e), lambda i, j, k: (i, j)),
            scratch_shapes=scratch,
        ),
        compiler_params=pltpu.CompilerParams(
            dimension_semantics=("parallel", "parallel", "arbitrary"),
            vmem_limit_bytes=_VMEM_LIMIT,
        ),
        cost_estimate=cost,
    )(a_p, b_p)

    if Mp != M or Np != N:
        out = out[:M, :N]
    return out


# ----------------------------------------------------------------------------
# Demo / correctness check
# ----------------------------------------------------------------------------
if __name__ == "__main__":
    key = jax.random.PRNGKey(0)
    ka, kb, kc, kd, ke, kf = jax.random.split(key, 6)

    # 1) Small shapes consistent with the module's 2-D matmul forward
    #    (exercises the gridless whole-in-VMEM path).
    a = jax.random.normal(ka, (8, 32), dtype=jnp.float32)
    b = jax.random.normal(kb, (32, 16), dtype=jnp.float32)
    out_small = jax.block_until_ready(matmul_double_b(a, b))
    ref_small = a @ (b + b)
    assert out_small.shape == ref_small.shape and out_small.dtype == ref_small.dtype
    assert jnp.allclose(out_small, ref_small, atol=1e-4, rtol=1e-4)

    # 2) Aligned medium shape, forced onto the tiled accumulator path
    #    (also exercises the >=2-parallel-blocks split for v7x's two TCs).
    a2 = jax.random.normal(kc, (256, 512), dtype=jnp.float32)
    b2 = jax.random.normal(kd, (512, 256), dtype=jnp.float32)
    out_big = jax.block_until_ready(matmul_double_b(a2, b2, _force_tiled=True))
    ref_big = a2 @ (b2 + b2)
    assert out_big.shape == ref_big.shape and out_big.dtype == ref_big.dtype
    assert jnp.allclose(out_big, ref_big, atol=1e-3, rtol=1e-3)

    # 3) Unaligned shape, forced tiled -> exercises the zero-pad + slice path.
    a3 = jax.random.normal(ke, (100, 130), dtype=jnp.float32)
    b3 = jax.random.normal(kf, (130, 70), dtype=jnp.float32)
    out_pad = jax.block_until_ready(matmul_double_b(a3, b3, _force_tiled=True))
    ref_pad = a3 @ (b3 + b3)
    assert out_pad.shape == ref_pad.shape and out_pad.dtype == ref_pad.dtype
    assert jnp.allclose(out_pad, ref_pad, atol=1e-3, rtol=1e-3)

    print("KERNEL_OK")
</pallas_src>

<mosaic_0001>
module attributes {stable_mosaic.version = 11 : i64} {
  func.func @_matmul_2x_single_kernel(%arg0: memref<8x32xf32, #tpu.memory_space<vmem>>, %arg1: memref<32x16xf32, #tpu.memory_space<vmem>>, %arg2: memref<8x16xf32, #tpu.memory_space<vmem>>) attributes {dimension_semantics = [], scalar_prefetch = 0 : i64, scratch_operands = 0 : i64, tpu.core_type = #tpu.core_type<tc>} {
    %c0 = arith.constant 0 : index
    %c0_0 = arith.constant 0 : index
    %0 = vector.load %arg0[%c0, %c0_0] : memref<8x32xf32, #tpu.memory_space<vmem>>, vector<8x32xf32>
    %c0_1 = arith.constant 0 : index
    %c0_2 = arith.constant 0 : index
    %1 = vector.load %arg1[%c0_1, %c0_2] : memref<32x16xf32, #tpu.memory_space<vmem>>, vector<32x16xf32>
    %cst = arith.constant dense<0.000000e+00> : vector<8x16xf32>
    %2 = tpu.matmul %0, %1, %cst {dimension_numbers = #tpu.dot_dimension_numbers<[1], [0], [0], [1], [0, 0, 1, 1], [], []>} : vector<8x32xf32>, vector<32x16xf32>, vector<8x16xf32> -> vector<8x16xf32>
    %cst_3 = arith.constant 2.000000e+00 : f32
    %3 = vector.broadcast %cst_3 : f32 to vector<8x16xf32>
    %4 = arith.mulf %3, %2 : vector<8x16xf32>
    %c0_4 = arith.constant 0 : index
    %c0_5 = arith.constant 0 : index
    %5 = vector.load %arg2[%c0_4, %c0_5] : memref<8x16xf32, #tpu.memory_space<vmem>>, vector<8x16xf32>
    tpu.vector_store %arg2[%c0_4, %c0_5], %4 {strides = array<i32>} : memref<8x16xf32, #tpu.memory_space<vmem>>, vector<8x16xf32>,
    return
  }
}

</mosaic_0001>

<llo_original>
// kernel: tpu_custom_call.1
$region0: #{tpu_custom_call.1}
  #allocation0 [shape = 'u32[]', space=smem, size = 0x4, offset = 0x4, fixed_abs, tag = 'smem constant byte address 0x4 - core index']
  #allocation1 [shape = 'u32[144,128]{1,0:T(1,128)}', space=vmem, size = 0x12000, scoped, tag = 'internal scratch']
  %s0 = inlined_call_operand.vmem [shape: f32[8,32], index: 0, kind: input, shape index: {}]
  %s1 = inlined_call_operand.vmem [shape: f32[32,16], index: 1, kind: input, shape index: {}]
  %s2 = inlined_call_operand.hbm [shape: f32[8,16], index: 2, kind: output, shape index: {}]
  %s3 = sld [smem:[#allocation0]]
  $region18: #{tpu_custom_call.1} parent=0
    _
  %s5 = ssub.s32 1, %s3
  %s6 = scalar_select 0, %s5, %s3
  $region1: #{tpu_custom_call.1} parent=0
    #allocation2 [shape = 'u8[4096]{0}', space=vmem, size = 0x1000, scoped, tag = 'output window, operand 0, single buffered']
    #allocation3 [shape = 's32[1]{0}', space=sflag, size = 0x4, scoped, tag = 'scoped memory for tpu_custom_call.1']
    %7 = vsyncpa [#allocation3], 0
    // Predicated region
    $region2: #{tpu_custom_call.1} parent=1 // pred_check
      _
    $region3: #{tpu_custom_call.1} parent=1 // pred_check_branch
      %9 = sbr.rel (0) target = $region5
    $region4: #{tpu_custom_call.1} parent=1 // pred_region
      _
    $region5: #{tpu_custom_call.1} parent=1 // pred_fallthru
      _
    // Predicated region
    $region6: #{tpu_custom_call.1} parent=1 // pred_check
      _
    $region7: #{tpu_custom_call.1} parent=1 // pred_check_branch
      %11 = sbr.rel (0) target = $region9
    $region8: #{tpu_custom_call.1} parent=1 // pred_region
      _
    $region9: #{tpu_custom_call.1} parent=1 // pred_fallthru
      _
    %v12 = vld [vmem:[%s0] sm:$0xff]
    %v13 = vld [vmem:[%s1] sm:$0xff]
    %v14 = vld [vmem:[%s1 + $0x8] sm:$0xff]
    %v15 = vld [vmem:[%s1 + $0x10] sm:$0xff]
    %v16 = vld [vmem:[%s1 + $0x18] sm:$0xff]
    %vm17 = vcmask 261120
    %v19 = vsel %vm17, %v12, 0
    %21 = vmatprep.subr.mxu0 0.0
    %22 = vmatpush1.msra.mxu0 %v13
    %23 = vmatprep.subr.mxu0 0.0
    %24 = vmatpush1.msra.mxu0 %v14
    %25 = vmatprep.subr.mxu0 0.0
    %26 = vmatpush1.msra.mxu0 %v15
    %27 = vmatprep.subr.mxu0 0.0
    %28 = vmatpush1.msra.mxu0 %v16
    %29 = vmatprep.subr.mxu0 0.0
    %30 = vmatpush1.msra.mxu0 0.0
    %31 = vmatprep.subr.mxu0 0.0
    %32 = vmatpush1.msra.mxu0 0.0
    %33 = vmatprep.subr.mxu0 0.0
    %34 = vmatpush1.msra.mxu0 0.0
    %35 = vmatprep.subr.mxu0 0.0
    %36 = vmatpush1.msra.mxu0 0.0
    %37 = vmatprep.subr.mxu0 0.0
    %38 = vmatpush1.msra.mxu0 0.0
    %39 = vmatprep.subr.mxu0 0.0
    %40 = vmatpush1.msra.mxu0 0.0
    %41 = vmatprep.subr.mxu0 0.0
    %42 = vmatpush1.msra.mxu0 0.0
    %43 = vmatprep.subr.mxu0 0.0
    %44 = vmatpush1.msra.mxu0 0.0
    %45 = vmatprep.subr.mxu0 0.0
    %46 = vmatpush1.msra.mxu0 0.0
    %47 = vmatprep.subr.mxu0 0.0
    %48 = vmatpush1.msra.mxu0 0.0
    %49 = vmatprep.subr.mxu0 0.0
    %50 = vmatpush1.msra.mxu0 0.0
    %51 = vmatprep.subr.mxu0 0.0
    %52 = vmatpush1.msra.mxu0 0.0
    %53 = vmatprep.subr.mxu0 0.0
    %54 = vmatpush1.msra.mxu0 0.0
    %55 = vmatprep.subr.mxu0 0.0
    %56 = vmatpush1.msra.mxu0 0.0
    %57 = vmatprep.subr.mxu0 0.0
    %58 = vmatpush1.msra.mxu0 0.0
    %59 = vmatprep.subr.mxu0 0.0
    %60 = vmatpush1.msra.mxu0 0.0
    %61 = vmatprep.subr.mxu0 0.0
    %62 = vmatpush1.msra.mxu0 0.0
    %63 = vmatprep.subr.mxu0 0.0
    %64 = vmatpush1.msra.mxu0 0.0
    %65 = vmatprep.subr.mxu0 0.0
    %66 = vmatpush1.msra.mxu0 0.0
    %67 = vmatprep.subr.mxu0 0.0
    %68 = vmatpush1.msra.mxu0 0.0
    %69 = vmatprep.subr.mxu0 0.0
    %70 = vmatpush1.msra.mxu0 0.0
    %71 = vmatprep.subr.mxu0 0.0
    %72 = vmatpush1.msra.mxu0 0.0
    %73 = vmatprep.subr.mxu0 0.0
    %74 = vmatpush1.msra.mxu0 0.0
    %75 = vmatprep.subr.mxu0 0.0
    %76 = vmatpush1.msra.mxu0 0.0
    %77 = vmatprep.subr.mxu0 0.0
    %78 = vmatpush1.msra.mxu0 0.0
    %79 = vmatprep.subr.mxu0 0.0
    %80 = vmatpush1.msra.mxu0 0.0
    %81 = vmatprep.subr.mxu0 0.0
    %82 = vmatpush1.msra.mxu0 0.0
    %83 = vmatprep.subr.mxu0 0.0
    %84 = vmatpush1.msra.mxu0 0.0
    %85 = vmatprep.mubr.f32.mxu0 0.0
    %86 = vmatmul.mubr.f32.gmra.mrb[0].mxu0 %v19
    %v87 = vpop.f32.mrb[0].mxu0
    %v88 = vadd.f32 0.0, %v87
    %v89 = vpop.f32.mrb[0].mxu0
    %90 = vdwg.mxu0
    %v91 = vmul.f32 %v88, 2.0
    %vm92 = vcmask 130048
    %93 = vst.msk [vmem:[#allocation2] sm:$0xff] %vm92, %v91
    // Predicated region
    $region10: #{tpu_custom_call.1} parent=1 // pred_check
      _
    $region11: #{tpu_custom_call.1} parent=1 // pred_check_branch
      %95 = sbr.rel (0) target = $region13
    $region12: #{tpu_custom_call.1} parent=1 // pred_region
      %s97 = ssub.s32 128, 128
      %98 = vsyncadd [#allocation3], %s97
      %s100 = sshll.u32 [#allocation2], 4
      %s101 = int_to_ptr.vmem [resolvable:$true] %s100
      %103 = dma.vmem_to_hbm [thread:$0]  %s101, 128, %s2, [#allocation3]
    $region13: #{tpu_custom_call.1} parent=1 // pred_fallthru
      _
    // Predicated region
    $region14: #{tpu_custom_call.1} parent=1 // pred_check
      _
    $region15: #{tpu_custom_call.1} parent=1 // pred_check_branch
      %105 = sbr.rel (0) target = $region17
    $region16: #{tpu_custom_call.1} parent=1 // pred_region
      %106 = dma.done [#allocation3], 128
    $region17: #{tpu_custom_call.1} parent=1 // pred_fallthru
      _
    %107 = vsyncpa [#allocation3], 1

</llo_original>
